<compile_context>
chip_gen: v7x
topology: tpu7x:2x2x1
jax: 0.10.0
libtpu: 0.0.40
codegen_flags: <defaults>
</compile_context>

<pallas_src>
import math
import functools

import jax
import jax.numpy as jnp
from jax import lax
from jax.experimental import pallas as pl
from jax.experimental.pallas import tpu as pltpu


_INV_SQRT2 = 1.0 / math.sqrt(2.0)


def _round_up(a, b):
    return (a + b - 1) // b * b


# ----------------------------------------------------------------------------- kernel ---

def ffn_block_kernel(x_ref, wg_ref, bg_ref, wd_ref, bd_ref, wu_ref, bu_ref,
                     gamma_ref, beta_ref, o_ref, *scratch,
                     eps, d_true, compute_dtype, approx_gelu):
    """One (row-tile, hidden-slice) step of the fused FFN block.

    The hidden axis is a reduction: partial up-projections are accumulated into the
    f32 accumulator (the resident output block when the output dtype is f32, else a
    dedicated VMEM scratch).  Residual add + LayerNorm run under pl.when(h == last).
    """
    h_idx = pl.program_id(1)
    n_h = pl.num_programs(1)
    acc_ref = scratch[0] if scratch else o_ref          # always f32 by construction

    x = x_ref[...]                                       # original precision (residual)
    xc = x.astype(compute_dtype)                         # MXU operand dtype (bf16 path)

    # gate / down projections for this H-slice, f32 accumulation on the MXU.
    x1 = jnp.dot(xc, wg_ref[...], preferred_element_type=jnp.float32) + bg_ref[...]
    x2 = jnp.dot(xc, wd_ref[...], preferred_element_type=jnp.float32) + bd_ref[...]

    if approx_gelu:
        # tanh-approx GELU -> EUP bundle slot (frees the VALU); opt-in, tiny numeric delta.
        c0 = jnp.float32(0.7978845608028654)             # sqrt(2/pi)
        c1 = jnp.float32(0.044715)
        g = 0.5 * x1 * (1.0 + jnp.tanh(c0 * (x1 + c1 * x1 * x1 * x1)))
    else:
        # PyTorch nn.GELU() default = exact erf formulation.
        g = 0.5 * x1 * (1.0 + lax.erf(x1 * jnp.float32(_INV_SQRT2)))
    h_act = g * x2                                       # (tm, th), f32

    # partial up-projection: (tm, th) @ (th, Dp), accumulated across the h grid axis.
    part = jnp.dot(h_act.astype(wu_ref.dtype), wu_ref[...],
                   preferred_element_type=jnp.float32)

    @pl.when(h_idx == 0)
    def _init():
        acc_ref[...] = part

    @pl.when(h_idx != 0)
    def _accumulate():
        acc_ref[...] += part

    @pl.when(h_idx == n_h - 1)
    def _finalize():
        # dropout(p=0.0) is the identity at inference; residual add in f32 from the
        # un-downcast input tile.
        # TODO(synk): nonzero-p training dropout (RNG mask) not implemented.
        y = acc_ref[...] + bu_ref[...] + x.astype(jnp.float32)

        d_pad = y.shape[-1]
        inv_d = jnp.float32(1.0 / d_true)
        mean = jnp.sum(y, axis=-1, keepdims=True) * inv_d   # padded cols of y are exact 0
        if d_pad == d_true:
            cen = y - mean
        else:
            # D was zero-padded to a lane multiple: mask the centered value so the
            # padded columns do not contaminate the variance.
            mask = lax.broadcasted_iota(jnp.int32, y.shape, 1) < d_true
            cen = jnp.where(mask, y - mean, jnp.float32(0.0))
        var = jnp.sum(cen * cen, axis=-1, keepdims=True) * inv_d
        y_hat = cen * lax.rsqrt(var + jnp.float32(eps))
        o_ref[...] = (y_hat * gamma_ref[...] + beta_ref[...]).astype(o_ref.dtype)


# ------------------------------------------------------------------ tile / budget logic ---

def _tpu_vmem_capacity():
    try:
        return int(pltpu.get_tpu_info().vmem_capacity_bytes)
    except Exception:
        return 64 * 1024 * 1024          # v7x floor: safe on every generation


def _generation_defaults(weight_itemsize):
    """(vmem_capacity, target row tile, min row tiles) per TPU generation.

    Row-tile targets follow the weight-stream roofline (AI ~= tm FLOP/byte in bf16,
    tm/2 in f32): v6e needs ~650 FLOP/byte, v7x ~310, v5e ~240.
    """
    kind = ""
    try:
        kind = jax.devices()[0].device_kind.lower()
    except Exception:
        pass
    vmem_cap = _tpu_vmem_capacity()
    if "v7" in kind:
        tm_target, min_row_tiles = 512, 2     # 2 TCs/chip: keep both fed
    elif "v6" in kind:
        tm_target, min_row_tiles = 1024, 1
    elif "v5" in kind:
        tm_target, min_row_tiles = 256, 1
    else:
        tm_target, min_row_tiles = 512, 1
    if weight_itemsize >= 4:                  # f32 weights: half the FLOP/byte
        tm_target *= 2
    return vmem_cap, tm_target, min_row_tiles


def _vmem_footprint(tm, th, d_pad, itm_w, itm_x, itm_o, use_scratch):
    # Conservative: assume the auto-pipeline double-buffers every block (constant-index
    # blocks also get 2 buffers by default; single-buffering them would save more).
    buf = 2
    wbytes = buf * 3 * d_pad * th * itm_w                 # wg, wd, wu slices
    xbytes = buf * tm * d_pad * itm_x                     # x tile
    obytes = buf * tm * d_pad * itm_o                     # output tile
    vecbytes = buf * (2 * 8 * th + 3 * 8 * d_pad) * 4     # biases / LN params (sublane pad)
    scratch = tm * d_pad * 4 if use_scratch else 0        # f32 accumulator (bf16 out only)
    interm = 4 * tm * th * 4                              # x1 / x2 / gelu temporaries, f32
    return wbytes + xbytes + obytes + vecbytes + scratch + interm


def _th_candidates(h_pad):
    return [c for c in range(h_pad, 0, -128) if h_pad % c == 0]


def _choose_tiles(n_rows, d_pad, h_pad, itm_w, itm_x, itm_o, use_scratch,
                  vmem_budget, tm_target, min_row_tiles):
    def fits(tm, th):
        return _vmem_footprint(tm, th, d_pad, itm_w, itm_x, itm_o,
                               use_scratch) <= vmem_budget

    n8 = _round_up(max(n_rows, 1), 8)
    tm_hi = max(8, min(tm_target, n8) // 8 * 8)
    if min_row_tiles > 1 and n8 >= 8 * min_row_tiles:
        tm_hi = min(tm_hi, max(8, (n8 // min_row_tiles) // 8 * 8))

    # 1) Prefer full weight residency (th == Hp): constant weight block indices mean the
    #    weights are DMA'd once total instead of once per row tile.
    tm = tm_hi
    while True:
        if fits(tm, h_pad):
            return tm, h_pad
        if tm <= 128:
            break
        tm = max(128, (tm // 2) // 8 * 8)

    # 2) Otherwise slice the hidden dim; keep the row tile as large as the budget allows
    #    (weight HBM traffic scales as (N/tm) * 3*D*H).
    tm = tm_hi
    while True:
        for th in _th_candidates(h_pad):
            if fits(tm, th):
                return tm, th
        if tm <= 8:
            return 8, min(128, h_pad)
        tm = max(8, (tm // 2) // 8 * 8)


# ---------------------------------------------------------------------------- wrapper ---

def ffn_block(x, params, *, tm=None, th=None, eps=1e-5,
              compute_dtype=jnp.float32, out_dtype=None,
              approximate_gelu=False, vmem_budget_frac=0.75):
    """x: (B, S, D). params: dict of weights (see init_params)."""
    B, S, D = x.shape
    H = 4 * D
    N = B * S

    out_dtype = x.dtype if out_dtype is None else jnp.dtype(out_dtype)

    # Lane-align D and H (padding is exact zeros; LayerNorm uses the true-D divisor).
    Dp = _round_up(D, 128)
    Hp = _round_up(H, 128)

    itm_w = jnp.dtype(compute_dtype).itemsize
    itm_x = jnp.dtype(x.dtype).itemsize
    itm_o = jnp.dtype(out_dtype).itemsize

    # Accumulate directly in the resident f32 output block when possible; only a bf16
    # (or other non-f32) output needs a dedicated f32 scratch accumulator.
    use_scratch = jnp.dtype(out_dtype) != jnp.dtype(jnp.float32)

    vmem_cap, tm_target, min_row_tiles = _generation_defaults(itm_w)
    vmem_budget = int(vmem_budget_frac * vmem_cap)

    auto_tm, auto_th = _choose_tiles(N, Dp, Hp, itm_w, itm_x, itm_o, use_scratch,
                                     vmem_budget, tm_target, min_row_tiles)
    tm = auto_tm if tm is None else tm
    th = auto_th if th is None else th
    assert tm % 8 == 0, "row tile must be a multiple of 8 sublanes"
    assert Hp % th == 0 and (th == Hp or th % 128 == 0), "bad hidden tile"

    n_pad = pl.cdiv(N, tm) * tm
    n_row_tiles = n_pad // tm
    n_h = Hp // th

    # Padded operands (all padding exact zeros). Padded rows go through the full
    # GELU/LayerNorm path (eps keeps rsqrt finite) and are discarded afterwards.
    x2d = jnp.pad(x.reshape(N, D), ((0, n_pad - N), (0, Dp - D)))

    def _pad2(a, r, c):
        return jnp.pad(a, ((0, r - a.shape[0]), (0, c - a.shape[1])))

    wg = _pad2(params["wg"].astype(compute_dtype), Dp, Hp)
    wd = _pad2(params["wd"].astype(compute_dtype), Dp, Hp)
    wu = _pad2(params["wu"].astype(compute_dtype), Hp, Dp)
    bg = _pad2(params["bg"].astype(jnp.float32), 1, Hp)
    bd = _pad2(params["bd"].astype(jnp.float32), 1, Hp)
    bu = _pad2(params["bu"].astype(jnp.float32), 1, Dp)
    gamma = _pad2(params["gamma"].astype(jnp.float32), 1, Dp)
    beta = _pad2(params["beta"].astype(jnp.float32), 1, Dp)

    fp = _vmem_footprint(tm, th, Dp, itm_w, itm_x, itm_o, use_scratch)
    vmem_limit = int(min(0.9 * vmem_cap, max(fp + fp // 2, 32 * 1024 * 1024)))

    # Weights are fetched once when fully resident (n_h == 1), else re-streamed per row tile.
    weight_passes = 1 if n_h == 1 else n_row_tiles
    cost = pl.CostEstimate(
        flops=int(6 * n_pad * Dp * Hp),
        transcendentals=int(n_pad * Hp),
        bytes_accessed=int(weight_passes * 3 * Dp * Hp * itm_w
                           + n_pad * Dp * (itm_x + itm_o)
                           + (2 * Hp + 3 * Dp) * 4),
    )

    kernel = functools.partial(
        ffn_block_kernel, eps=eps, d_true=D,
        compute_dtype=compute_dtype, approx_gelu=approximate_gelu)

    scratch_shapes = (pltpu.VMEM((tm, Dp), jnp.float32),) if use_scratch else ()

    out2d = pl.pallas_call(
        kernel,
        out_shape=jax.ShapeDtypeStruct((n_pad, Dp), out_dtype),
        grid_spec=pltpu.PrefetchScalarGridSpec(
            num_scalar_prefetch=0,
            grid=(n_row_tiles, n_h),
            in_specs=[
                pl.BlockSpec((tm, Dp), lambda i, h: (i, 0)),    # x rows
                pl.BlockSpec((Dp, th), lambda i, h: (0, h)),    # gate weight slice
                pl.BlockSpec((1, th), lambda i, h: (0, h)),     # gate bias slice
                pl.BlockSpec((Dp, th), lambda i, h: (0, h)),    # down weight slice
                pl.BlockSpec((1, th), lambda i, h: (0, h)),     # down bias slice
                pl.BlockSpec((th, Dp), lambda i, h: (h, 0)),    # up weight slice
                pl.BlockSpec((1, Dp), lambda i, h: (0, 0)),     # up bias
                pl.BlockSpec((1, Dp), lambda i, h: (0, 0)),     # layernorm gamma
                pl.BlockSpec((1, Dp), lambda i, h: (0, 0)),     # layernorm beta
            ],
            out_specs=pl.BlockSpec((tm, Dp), lambda i, h: (i, 0)),
            scratch_shapes=scratch_shapes,
        ),
        compiler_params=pltpu.CompilerParams(
            dimension_semantics=("parallel", "arbitrary"),
            vmem_limit_bytes=vmem_limit,
        ),
        cost_estimate=cost,
    )(x2d, wg, bg, wd, bd, wu, bu, gamma, beta)

    return out2d[:N, :D].reshape(B, S, D)


# --------------------------------------------------------------------- params / reference ---

def init_params(key, d_model):
    """Deterministic init mirroring nn.Linear / nn.LayerNorm parameter shapes.

    nn.Linear(in, out).weight is (out, in); we store the transpose (in, out)
    so the kernel computes x @ W directly (same math as x @ weight.T).
    """
    H = 4 * d_model
    ks = jax.random.split(key, 6)

    def linear(kw, kb, fan_in, fan_out):
        bound = 1.0 / math.sqrt(fan_in)
        w = jax.random.uniform(kw, (fan_in, fan_out), jnp.float32, -bound, bound)
        b = jax.random.uniform(kb, (1, fan_out), jnp.float32, -bound, bound)
        return w, b

    wg, bg = linear(ks[0], ks[1], d_model, H)   # gate_proj
    wd, bd = linear(ks[2], ks[3], d_model, H)   # down_proj
    wu, bu = linear(ks[4], ks[5], H, d_model)   # up_proj
    gamma = jnp.ones((1, d_model), jnp.float32)
    beta = jnp.zeros((1, d_model), jnp.float32)
    return dict(wg=wg, bg=bg, wd=wd, bd=bd, wu=wu, bu=bu, gamma=gamma, beta=beta)


def _reference(x, p, eps=1e-5):
    """Pure-JAX reference of the PyTorch forward for a sanity check."""
    identity = x
    x1 = x @ p["wg"] + p["bg"]
    x2 = x @ p["wd"] + p["bd"]
    g = 0.5 * x1 * (1.0 + lax.erf(x1 * jnp.float32(_INV_SQRT2)))
    y = (g * x2) @ p["wu"] + p["bu"]
    y = y + identity
    mean = jnp.mean(y, axis=-1, keepdims=True)
    var = jnp.mean(jnp.square(y - mean), axis=-1, keepdims=True)
    return (y - mean) / jnp.sqrt(var + eps) * p["gamma"] + p["beta"]


# ------------------------------------------------------------------------------ tests ---

if __name__ == "__main__":
    key = jax.random.PRNGKey(0)
    k_x, k_p = jax.random.split(key)

    B, S, D = 2, 8, 64            # N = 16 rows, d_model = 64, hidden H = 256
    x = jax.random.normal(k_x, (B, S, D), jnp.float32)
    params = init_params(k_p, D)

    ref = _reference(x, params)

    # 1) generation-aware auto tiling, f32 compute — exact parity with the reference.
    out = jax.block_until_ready(ffn_block(x, params))
    assert out.shape == (B, S, D)
    assert jnp.allclose(out, ref, atol=1e-4, rtol=1e-4), "f32 auto-tile mismatch"

    # 2) explicit small tiles — exercises the multi-step row grid AND the hidden-axis
    #    reduction accumulating directly into the resident f32 output block.
    out2 = jax.block_until_ready(ffn_block(x, params, tm=8, th=128))
    assert jnp.allclose(out2, ref, atol=1e-4, rtol=1e-4), "tiled-reduction mismatch"

    # 3) bf16 weights / MXU fast path; residual + LayerNorm stay f32 (exact residual).
    out3 = jax.block_until_ready(ffn_block(x, params, compute_dtype=jnp.bfloat16))
    assert jnp.allclose(out3, ref, atol=1e-1, rtol=5e-2), "bf16 path mismatch"

    # 4) bf16 output (scratch-accumulator path) + tanh-approx GELU (EUP path).
    out4 = jax.block_until_ready(
        ffn_block(x, params, compute_dtype=jnp.bfloat16, out_dtype=jnp.bfloat16,
                  approximate_gelu=True, tm=8, th=128))
    assert jnp.allclose(out4.astype(jnp.float32), ref, atol=1.5e-1, rtol=1e-1), \
        "bf16-out / approx-gelu mismatch"

    print("KERNEL_OK")
</pallas_src>

<mosaic_0001>
module attributes {stable_mosaic.version = 11 : i64} {
  func.func @ffn_block_kernel(%arg0: i32, %arg1: i32, %arg2: memref<16x128xf32, #tpu.memory_space<vmem>>, %arg3: memref<128x256xf32, #tpu.memory_space<vmem>>, %arg4: memref<1x256xf32, #tpu.memory_space<vmem>>, %arg5: memref<128x256xf32, #tpu.memory_space<vmem>>, %arg6: memref<1x256xf32, #tpu.memory_space<vmem>>, %arg7: memref<256x128xf32, #tpu.memory_space<vmem>>, %arg8: memref<1x128xf32, #tpu.memory_space<vmem>>, %arg9: memref<1x128xf32, #tpu.memory_space<vmem>>, %arg10: memref<1x128xf32, #tpu.memory_space<vmem>>, %arg11: memref<16x128xf32, #tpu.memory_space<vmem>>) attributes {dimension_semantics = [#tpu.dimension_semantics<parallel>, #tpu.dimension_semantics<arbitrary>], iteration_bounds = array<i64: 1, 1>, scalar_prefetch = 0 : i64, scratch_operands = 0 : i64, tpu.core_type = #tpu.core_type<tc>, window_params = [{transform_indices = @transform_0, window_bounds = array<i64: 16, 128>}, {transform_indices = @transform_1, window_bounds = array<i64: 128, 256>}, {transform_indices = @transform_2, window_bounds = array<i64: 1, 256>}, {transform_indices = @transform_3, window_bounds = array<i64: 128, 256>}, {transform_indices = @transform_4, window_bounds = array<i64: 1, 256>}, {transform_indices = @transform_5, window_bounds = array<i64: 256, 128>}, {pipeline_mode = #tpu.pipeline_mode<synchronous>, transform_indices = @transform_6, window_bounds = array<i64: 1, 128>}, {pipeline_mode = #tpu.pipeline_mode<synchronous>, transform_indices = @transform_7, window_bounds = array<i64: 1, 128>}, {pipeline_mode = #tpu.pipeline_mode<synchronous>, transform_indices = @transform_8, window_bounds = array<i64: 1, 128>}, {transform_indices = @transform_9, window_bounds = array<i64: 16, 128>}]} {
    %c0 = arith.constant 0 : index
    %c0_0 = arith.constant 0 : index
    %0 = vector.load %arg2[%c0, %c0_0] : memref<16x128xf32, #tpu.memory_space<vmem>>, vector<16x128xf32>
    %c0_1 = arith.constant 0 : index
    %c0_2 = arith.constant 0 : index
    %1 = vector.load %arg3[%c0_1, %c0_2] : memref<128x256xf32, #tpu.memory_space<vmem>>, vector<128x256xf32>
    %cst = arith.constant dense<0.000000e+00> : vector<16x256xf32>
    %2 = tpu.matmul %0, %1, %cst {dimension_numbers = #tpu.dot_dimension_numbers<[1], [0], [0], [1], [0, 0, 1, 1], [], []>} : vector<16x128xf32>, vector<128x256xf32>, vector<16x256xf32> -> vector<16x256xf32>
    %c0_3 = arith.constant 0 : index
    %c0_4 = arith.constant 0 : index
    %3 = vector.load %arg4[%c0_3, %c0_4] : memref<1x256xf32, #tpu.memory_space<vmem>>, vector<1x256xf32>
    %4 = vector.broadcast %3 : vector<1x256xf32> to vector<16x256xf32>
    %5 = arith.addf %2, %4 : vector<16x256xf32>
    %c0_5 = arith.constant 0 : index
    %c0_6 = arith.constant 0 : index
    %6 = vector.load %arg5[%c0_5, %c0_6] : memref<128x256xf32, #tpu.memory_space<vmem>>, vector<128x256xf32>
    %cst_7 = arith.constant dense<0.000000e+00> : vector<16x256xf32>
    %7 = tpu.matmul %0, %6, %cst_7 {dimension_numbers = #tpu.dot_dimension_numbers<[1], [0], [0], [1], [0, 0, 1, 1], [], []>} : vector<16x128xf32>, vector<128x256xf32>, vector<16x256xf32> -> vector<16x256xf32>
    %c0_8 = arith.constant 0 : index
    %c0_9 = arith.constant 0 : index
    %8 = vector.load %arg6[%c0_8, %c0_9] : memref<1x256xf32, #tpu.memory_space<vmem>>, vector<1x256xf32>
    %9 = vector.broadcast %8 : vector<1x256xf32> to vector<16x256xf32>
    %10 = arith.addf %7, %9 : vector<16x256xf32>
    %cst_10 = arith.constant 5.000000e-01 : f32
    %11 = vector.broadcast %cst_10 : f32 to vector<16x256xf32>
    %12 = arith.mulf %11, %5 : vector<16x256xf32>
    %cst_11 = arith.constant 0.707106769 : f32
    %13 = vector.broadcast %cst_11 : f32 to vector<16x256xf32>
    %14 = arith.mulf %5, %13 : vector<16x256xf32>
    %15 = math.erf %14 : vector<16x256xf32>
    %cst_12 = arith.constant 1.000000e+00 : f32
    %16 = vector.broadcast %cst_12 : f32 to vector<16x256xf32>
    %17 = arith.addf %16, %15 : vector<16x256xf32>
    %18 = arith.mulf %12, %17 : vector<16x256xf32>
    %19 = arith.mulf %18, %10 : vector<16x256xf32>
    %c0_13 = arith.constant 0 : index
    %c0_14 = arith.constant 0 : index
    %20 = vector.load %arg7[%c0_13, %c0_14] : memref<256x128xf32, #tpu.memory_space<vmem>>, vector<256x128xf32>
    %cst_15 = arith.constant dense<0.000000e+00> : vector<16x128xf32>
    %21 = tpu.matmul %19, %20, %cst_15 {dimension_numbers = #tpu.dot_dimension_numbers<[1], [0], [0], [1], [0, 0, 1, 1], [], []>} : vector<16x256xf32>, vector<256x128xf32>, vector<16x128xf32> -> vector<16x128xf32>
    %c0_i32 = arith.constant 0 : i32
    %22 = arith.cmpi eq, %arg1, %c0_i32 : i32
    %23 = arith.extui %22 : i1 to i32
    %c0_i32_16 = arith.constant 0 : i32
    %24 = arith.cmpi ne, %23, %c0_i32_16 : i32
    scf.if %24 {
      %c0_21 = arith.constant 0 : index
      %c0_22 = arith.constant 0 : index
      %31 = vector.load %arg11[%c0_21, %c0_22] : memref<16x128xf32, #tpu.memory_space<vmem>>, vector<16x128xf32>
      tpu.vector_store %arg11[%c0_21, %c0_22], %21 {strides = array<i32>} : memref<16x128xf32, #tpu.memory_space<vmem>>, vector<16x128xf32>,
    } else {
    }
    %c0_i32_17 = arith.constant 0 : i32
    %25 = arith.cmpi ne, %arg1, %c0_i32_17 : i32
    %26 = arith.extui %25 : i1 to i32
    %c0_i32_18 = arith.constant 0 : i32
    %27 = arith.cmpi ne, %26, %c0_i32_18 : i32
    scf.if %27 {
      %c0_21 = arith.constant 0 : index
      %c0_22 = arith.constant 0 : index
      %31 = vector.load %arg11[%c0_21, %c0_22] : memref<16x128xf32, #tpu.memory_space<vmem>>, vector<16x128xf32>
      %32 = arith.addf %31, %21 : vector<16x128xf32>
      %c0_23 = arith.constant 0 : index
      %c0_24 = arith.constant 0 : index
      %33 = vector.load %arg11[%c0_23, %c0_24] : memref<16x128xf32, #tpu.memory_space<vmem>>, vector<16x128xf32>
      tpu.vector_store %arg11[%c0_23, %c0_24], %32 {strides = array<i32>} : memref<16x128xf32, #tpu.memory_space<vmem>>, vector<16x128xf32>,
    } else {
    }
    %c0_i32_19 = arith.constant 0 : i32
    %28 = arith.cmpi eq, %arg1, %c0_i32_19 : i32
    %29 = arith.extui %28 : i1 to i32
    %c0_i32_20 = arith.constant 0 : i32
    %30 = arith.cmpi ne, %29, %c0_i32_20 : i32
    scf.if %30 {
      %c0_21 = arith.constant 0 : index
      %c0_22 = arith.constant 0 : index
      %31 = vector.load %arg11[%c0_21, %c0_22] : memref<16x128xf32, #tpu.memory_space<vmem>>, vector<16x128xf32>
      %c0_23 = arith.constant 0 : index
      %c0_24 = arith.constant 0 : index
      %32 = vector.load %arg8[%c0_23, %c0_24] : memref<1x128xf32, #tpu.memory_space<vmem>>, vector<1x128xf32>
      %33 = vector.broadcast %32 : vector<1x128xf32> to vector<16x128xf32>
      %34 = arith.addf %31, %33 : vector<16x128xf32>
      %35 = arith.addf %34, %0 : vector<16x128xf32>
      %cst_25 = arith.constant dense<0.000000e+00> : vector<16xf32>
      %36 = vector.multi_reduction <add>, %35, %cst_25 [1] : vector<16x128xf32> to vector<16xf32>
      %37 = vector.shape_cast %36 : vector<16xf32> to vector<16x1xf32>
      %cst_26 = arith.constant 1.562500e-02 : f32
      %38 = vector.broadcast %cst_26 : f32 to vector<16x1xf32>
      %39 = arith.mulf %37, %38 : vector<16x1xf32>
      %40 = tpu.iota {dimensions = array<i32: 1>} : vector<16x128xi32>
      %c64_i32 = arith.constant 64 : i32
      %41 = vector.broadcast %c64_i32 : i32 to vector<16x128xi32>
      %42 = arith.cmpi slt, %40, %41 : vector<16x128xi32>
      %43 = vector.broadcast %39 : vector<16x1xf32> to vector<16x128xf32>
      %44 = arith.subf %35, %43 : vector<16x128xf32>
      %cst_27 = arith.constant 0.000000e+00 : f32
      %45 = vector.broadcast %cst_27 : f32 to vector<16x128xf32>
      %46 = arith.select %42, %44, %45 : vector<16x128xi1>, vector<16x128xf32>
      %47 = arith.mulf %46, %46 : vector<16x128xf32>
      %cst_28 = arith.constant dense<0.000000e+00> : vector<16xf32>
      %48 = vector.multi_reduction <add>, %47, %cst_28 [1] : vector<16x128xf32> to vector<16xf32>
      %49 = vector.shape_cast %48 : vector<16xf32> to vector<16x1xf32>
      %cst_29 = arith.constant 1.562500e-02 : f32
      %50 = vector.broadcast %cst_29 : f32 to vector<16x1xf32>
      %51 = arith.mulf %49, %50 : vector<16x1xf32>
      %cst_30 = arith.constant 9.99999974E-6 : f32
      %52 = vector.broadcast %cst_30 : f32 to vector<16x1xf32>
      %53 = arith.addf %51, %52 : vector<16x1xf32>
      %54 = math.rsqrt %53 : vector<16x1xf32>
      %55 = vector.broadcast %54 : vector<16x1xf32> to vector<16x128xf32>
      %56 = arith.mulf %46, %55 : vector<16x128xf32>
      %c0_31 = arith.constant 0 : index
      %c0_32 = arith.constant 0 : index
      %57 = vector.load %arg9[%c0_31, %c0_32] : memref<1x128xf32, #tpu.memory_space<vmem>>, vector<1x128xf32>
      %58 = vector.broadcast %57 : vector<1x128xf32> to vector<16x128xf32>
      %59 = arith.mulf %56, %58 : vector<16x128xf32>
      %c0_33 = arith.constant 0 : index
      %c0_34 = arith.constant 0 : index
      %60 = vector.load %arg10[%c0_33, %c0_34] : memref<1x128xf32, #tpu.memory_space<vmem>>, vector<1x128xf32>
      %61 = vector.broadcast %60 : vector<1x128xf32> to vector<16x128xf32>
      %62 = arith.addf %59, %61 : vector<16x128xf32>
      %c0_35 = arith.constant 0 : index
      %c0_36 = arith.constant 0 : index
      %63 = vector.load %arg11[%c0_35, %c0_36] : memref<16x128xf32, #tpu.memory_space<vmem>>, vector<16x128xf32>
      tpu.vector_store %arg11[%c0_35, %c0_36], %62 {strides = array<i32>} : memref<16x128xf32, #tpu.memory_space<vmem>>, vector<16x128xf32>,
    } else {
    }
    return
  }
  func.func @transform_0(%arg0: i32, %arg1: i32) -> (i32, i32) {
    %c0_i32 = arith.constant 0 : i32
    %c0_i32_0 = arith.constant 0 : i32
    return %arg0, %c0_i32 : i32, i32
  }
  func.func @transform_1(%arg0: i32, %arg1: i32) -> (i32, i32) {
    %c0_i32 = arith.constant 0 : i32
    %c0_i32_0 = arith.constant 0 : i32
    return %c0_i32, %arg1 : i32, i32
  }
  func.func @transform_2(%arg0: i32, %arg1: i32) -> (i32, i32) {
    %c0_i32 = arith.constant 0 : i32
    %c0_i32_0 = arith.constant 0 : i32
    return %c0_i32, %arg1 : i32, i32
  }
  func.func @transform_3(%arg0: i32, %arg1: i32) -> (i32, i32) {
    %c0_i32 = arith.constant 0 : i32
    %c0_i32_0 = arith.constant 0 : i32
    return %c0_i32, %arg1 : i32, i32
  }
  func.func @transform_4(%arg0: i32, %arg1: i32) -> (i32, i32) {
    %c0_i32 = arith.constant 0 : i32
    %c0_i32_0 = arith.constant 0 : i32
    return %c0_i32, %arg1 : i32, i32
  }
  func.func @transform_5(%arg0: i32, %arg1: i32) -> (i32, i32) {
    %c0_i32 = arith.constant 0 : i32
    %c0_i32_0 = arith.constant 0 : i32
    return %arg1, %c0_i32 : i32, i32
  }
  func.func @transform_6(%arg0: i32, %arg1: i32) -> (i32, i32) {
    %c0_i32 = arith.constant 0 : i32
    %c0_i32_0 = arith.constant 0 : i32
    %c0_i32_1 = arith.constant 0 : i32
    return %c0_i32, %c0_i32_0 : i32, i32
  }
  func.func @transform_7(%arg0: i32, %arg1: i32) -> (i32, i32) {
    %c0_i32 = arith.constant 0 : i32
    %c0_i32_0 = arith.constant 0 : i32
    %c0_i32_1 = arith.constant 0 : i32
    return %c0_i32, %c0_i32_0 : i32, i32
  }
  func.func @transform_8(%arg0: i32, %arg1: i32) -> (i32, i32) {
    %c0_i32 = arith.constant 0 : i32
    %c0_i32_0 = arith.constant 0 : i32
    %c0_i32_1 = arith.constant 0 : i32
    return %c0_i32, %c0_i32_0 : i32, i32
  }
  func.func @transform_9(%arg0: i32, %arg1: i32) -> (i32, i32) {
    %c0_i32 = arith.constant 0 : i32
    %c0_i32_0 = arith.constant 0 : i32
    return %arg0, %c0_i32 : i32, i32
  }
}

</mosaic_0001>

<llo_original>
// kernel: tpu_custom_call.1
$region0: #{tpu_custom_call.1}
  #allocation0 [shape = 'u32[]', space=smem, size = 0x4, offset = 0x4, fixed_abs, tag = 'smem constant byte address 0x4 - core index']
  #allocation1 [shape = 'u32[144,128]{1,0:T(1,128)}', space=vmem, size = 0x12000, scoped, tag = 'internal scratch']
  %s0 = inlined_call_operand.hbm [shape: f32[16,128], index: 0, kind: input, shape index: {}]
  %s1 = inlined_call_operand.hbm [shape: f32[128,256], index: 1, kind: input, shape index: {}]
  %s2 = inlined_call_operand.vmem [shape: f32[1,256], index: 2, kind: input, shape index: {}]
  %s3 = inlined_call_operand.hbm [shape: f32[128,256], index: 3, kind: input, shape index: {}]
  %s4 = inlined_call_operand.vmem [shape: f32[1,256], index: 4, kind: input, shape index: {}]
  %s5 = inlined_call_operand.hbm [shape: f32[256,128], index: 5, kind: input, shape index: {}]
  %s6 = inlined_call_operand.vmem [shape: f32[1,128], index: 6, kind: input, shape index: {}]
  %s7 = inlined_call_operand.vmem [shape: f32[1,128], index: 7, kind: input, shape index: {}]
  %s8 = inlined_call_operand.vmem [shape: f32[1,128], index: 8, kind: input, shape index: {}]
  %s9 = inlined_call_operand.hbm [shape: f32[16,128], index: 9, kind: output, shape index: {}]
  %s10 = sld [smem:[#allocation0]]
  $region74: #{tpu_custom_call.1} parent=0
    _
  %s12 = ssub.s32 1, %s10
  %s13 = scalar_select 0, %s12, %s10
  $region1: #{tpu_custom_call.1} parent=0
    #allocation2 [shape = 'u8[8192]{0}', space=vmem, size = 0x2000, scoped, tag = 'input window, operand 0, single buffered']
    #allocation3 [shape = 's32[1]{0}', space=sflag, size = 0x4, scoped, tag = 'scoped memory for tpu_custom_call.1']
    #allocation4 [shape = 's32[1]{0}', space=sflag, size = 0x4, scoped, tag = 'scoped memory for tpu_custom_call.1']
    #allocation5 [shape = 'u8[131072]{0}', space=vmem, size = 0x20000, scoped, tag = 'input window, operand 1, single buffered']
    #allocation6 [shape = 's32[1]{0}', space=sflag, size = 0x4, scoped, tag = 'scoped memory for tpu_custom_call.1']
    #allocation7 [shape = 'u8[131072]{0}', space=vmem, size = 0x20000, scoped, tag = 'input window, operand 3, single buffered']
    #allocation8 [shape = 'u8[131072]{0}', space=vmem, size = 0x20000, scoped, tag = 'input window, operand 5, single buffered']
    #allocation9 [shape = 's32[1]{0}', space=sflag, size = 0x4, scoped, tag = 'scoped memory for tpu_custom_call.1']
    #allocation10 [shape = 'u8[8192]{0}', space=vmem, size = 0x2000, scoped, tag = 'output window, operand 0, single buffered']
    %14 = vsyncpa [#allocation3], 0
    %15 = vsyncpa [#allocation6], 0
    %16 = vsyncpa [#allocation9], 0
    %17 = vsyncpa [#allocation4], 0
    // Predicated region
    $region2: #{tpu_custom_call.1} parent=1 // pred_check
      _
    $region3: #{tpu_custom_call.1} parent=1 // pred_check_branch
      %19 = sbr.rel (0) target = $region5
    $region4: #{tpu_custom_call.1} parent=1 // pred_region
      %s21 = ssub.s32 256, 256
      %22 = vsyncadd [#allocation3], %s21
      %s23 = sshll.u32 [#allocation2], 4
      %s24 = int_to_ptr.vmem [resolvable:$true] %s23
      %29 = dma.hbm_to_vmem [thread:$0]  %s0, 256, %s24, [#allocation3], 128, 128, 8
    $region5: #{tpu_custom_call.1} parent=1 // pred_fallthru
      _
    // Predicated region
    $region6: #{tpu_custom_call.1} parent=1 // pred_check
      _
    $region7: #{tpu_custom_call.1} parent=1 // pred_check_branch
      %31 = sbr.rel (0) target = $region9
    $region8: #{tpu_custom_call.1} parent=1 // pred_region
      %s33 = ssub.s32 4096, 4096
      %34 = vsyncadd [#allocation6], %s33
      %s35 = sshll.u32 [#allocation5], 4
      %s36 = int_to_ptr.vmem [resolvable:$true] %s35
      %41 = dma.hbm_to_vmem [thread:$0]  %s1, 4096, %s36, [#allocation6], 256, 256, 16
    $region9: #{tpu_custom_call.1} parent=1 // pred_fallthru
      _
    // Predicated region
    $region10: #{tpu_custom_call.1} parent=1 // pred_check
      _
    $region11: #{tpu_custom_call.1} parent=1 // pred_check_branch
      %43 = sbr.rel (0) target = $region13
    $region12: #{tpu_custom_call.1} parent=1 // pred_region
      _
    $region13: #{tpu_custom_call.1} parent=1 // pred_fallthru
      _
    // Predicated region
    $region14: #{tpu_custom_call.1} parent=1 // pred_check
      _
    $region15: #{tpu_custom_call.1} parent=1 // pred_check_branch
      %45 = sbr.rel (0) target = $region17
    $region16: #{tpu_custom_call.1} parent=1 // pred_region
      %s47 = ssub.s32 4096, 4096
      %48 = vsyncadd [#allocation6], %s47
      %s49 = sshll.u32 [#allocation7], 4
      %s50 = int_to_ptr.vmem [resolvable:$true] %s49
      %55 = dma.hbm_to_vmem [thread:$0]  %s3, 4096, %s50, [#allocation6], 256, 256, 16
    $region17: #{tpu_custom_call.1} parent=1 // pred_fallthru
      _
    // Predicated region
    $region18: #{tpu_custom_call.1} parent=1 // pred_check
      _
    $region19: #{tpu_custom_call.1} parent=1 // pred_check_branch
      %57 = sbr.rel (0) target = $region21
    $region20: #{tpu_custom_call.1} parent=1 // pred_region
      _
    $region21: #{tpu_custom_call.1} parent=1 // pred_fallthru
      _
    // Predicated region
    $region22: #{tpu_custom_call.1} parent=1 // pred_check
      _
    $region23: #{tpu_custom_call.1} parent=1 // pred_check_branch
      %59 = sbr.rel (0) target = $region25
    $region24: #{tpu_custom_call.1} parent=1 // pred_region
      %s61 = ssub.s32 4096, 4096
      %62 = vsyncadd [#allocation9], %s61
      %s63 = sshll.u32 [#allocation8], 4
      %s64 = int_to_ptr.vmem [resolvable:$true] %s63
      %69 = dma.hbm_to_vmem [thread:$0]  %s5, 4096, %s64, [#allocation9], 128, 128, 8
    $region25: #{tpu_custom_call.1} parent=1 // pred_fallthru
      _
    // Predicated region
    $region26: #{tpu_custom_call.1} parent=1 // pred_check
      _
    $region27: #{tpu_custom_call.1} parent=1 // pred_check_branch
      %71 = sbr.rel (0) target = $region29
    $region28: #{tpu_custom_call.1} parent=1 // pred_region
      _
    $region29: #{tpu_custom_call.1} parent=1 // pred_fallthru
      _
    // Predicated region
    $region30: #{tpu_custom_call.1} parent=1 // pred_check
      _
    $region31: #{tpu_custom_call.1} parent=1 // pred_check_branch
      %73 = sbr.rel (0) target = $region33
    $region32: #{tpu_custom_call.1} parent=1 // pred_region
      _
    $region33: #{tpu_custom_call.1} parent=1 // pred_fallthru
      _
    // Predicated region
    $region34: #{tpu_custom_call.1} parent=1 // pred_check
      _
    $region35: #{tpu_custom_call.1} parent=1 // pred_check_branch
      %75 = sbr.rel (0) target = $region37
    $region36: #{tpu_custom_call.1} parent=1 // pred_region
      _
    $region37: #{tpu_custom_call.1} parent=1 // pred_fallthru
      _
    // Predicated region
    $region38: #{tpu_custom_call.1} parent=1 // pred_check
      _
    $region39: #{tpu_custom_call.1} parent=1 // pred_check_branch
      %77 = sbr.rel (0) target = $region41
    $region40: #{tpu_custom_call.1} parent=1 // pred_region
      %78 = dma.done [#allocation3], 256
    $region41: #{tpu_custom_call.1} parent=1 // pred_fallthru
      _
    // Predicated region
    $region42: #{tpu_custom_call.1} parent=1 // pred_check
      _
    $region43: #{tpu_custom_call.1} parent=1 // pred_check_branch
      %80 = sbr.rel (0) target = $region45
    $region44: #{tpu_custom_call.1} parent=1 // pred_region
      %81 = dma.done [#allocation6], 4096
    $region45: #{tpu_custom_call.1} parent=1 // pred_fallthru
      _
    // Predicated region
    $region46: #{tpu_custom_call.1} parent=1 // pred_check
      _
    $region47: #{tpu_custom_call.1} parent=1 // pred_check_branch
      %83 = sbr.rel (0) target = $region49
    $region48: #{tpu_custom_call.1} parent=1 // pred_region
      %84 = dma.done [#allocation6], 4096
    $region49: #{tpu_custom_call.1} parent=1 // pred_fallthru
      _
    // Predicated region
    $region50: #{tpu_custom_call.1} parent=1 // pred_check
      _
    $region51: #{tpu_custom_call.1} parent=1 // pred_check_branch
      %86 = sbr.rel (0) target = $region53
    $region52: #{tpu_custom_call.1} parent=1 // pred_region
      %87 = dma.done [#allocation9], 4096
    $region53: #{tpu_custom_call.1} parent=1 // pred_fallthru
      _
    %v88 = vld [vmem:[#allocation2] sm:$0xff]
    %v89 = vld [vmem:[#allocation2 + $0x8] sm:$0xff]
    %v90 = vld [vmem:[#allocation5] sm:$0xff]
    %v91 = vld [vmem:[#allocation5 + $0x8] sm:$0xff]
    %v92 = vld [vmem:[#allocation5 + $0x10] sm:$0xff]
    %v93 = vld [vmem:[#allocation5 + $0x18] sm:$0xff]
    %v94 = vld [vmem:[#allocation5 + $0x20] sm:$0xff]
    %v95 = vld [vmem:[#allocation5 + $0x28] sm:$0xff]
    %v96 = vld [vmem:[#allocation5 + $0x30] sm:$0xff]
    %v97 = vld [vmem:[#allocation5 + $0x38] sm:$0xff]
    %v98 = vld [vmem:[#allocation5 + $0x40] sm:$0xff]
    %v99 = vld [vmem:[#allocation5 + $0x48] sm:$0xff]
    %v100 = vld [vmem:[#allocation5 + $0x50] sm:$0xff]
    %v101 = vld [vmem:[#allocation5 + $0x58] sm:$0xff]
    %v102 = vld [vmem:[#allocation5 + $0x60] sm:$0xff]
    %v103 = vld [vmem:[#allocation5 + $0x68] sm:$0xff]
    %v104 = vld [vmem:[#allocation5 + $0x70] sm:$0xff]
    %v105 = vld [vmem:[#allocation5 + $0x78] sm:$0xff]
    %v106 = vld [vmem:[#allocation5 + $0x80] sm:$0xff]
    %v107 = vld [vmem:[#allocation5 + $0x88] sm:$0xff]
    %v108 = vld [vmem:[#allocation5 + $0x90] sm:$0xff]
    %v109 = vld [vmem:[#allocation5 + $0x98] sm:$0xff]
    %v110 = vld [vmem:[#allocation5 + $0xa0] sm:$0xff]
    %v111 = vld [vmem:[#allocation5 + $0xa8] sm:$0xff]
    %v112 = vld [vmem:[#allocation5 + $0xb0] sm:$0xff]
    %v113 = vld [vmem:[#allocation5 + $0xb8] sm:$0xff]
    %v114 = vld [vmem:[#allocation5 + $0xc0] sm:$0xff]
    %v115 = vld [vmem:[#allocation5 + $0xc8] sm:$0xff]
    %v116 = vld [vmem:[#allocation5 + $0xd0] sm:$0xff]
    %v117 = vld [vmem:[#allocation5 + $0xd8] sm:$0xff]
    %v118 = vld [vmem:[#allocation5 + $0xe0] sm:$0xff]
    %v119 = vld [vmem:[#allocation5 + $0xe8] sm:$0xff]
    %v120 = vld [vmem:[#allocation5 + $0xf0] sm:$0xff]
    %v121 = vld [vmem:[#allocation5 + $0xf8] sm:$0xff]
    %v122 = vld [vmem:[%s2] sm:$0x3]
    %v124 = vlaneseq
    %v125 = vshrl.u32 %v124, 7
    %v126 = vsub.s32 0, %v125
    %v127 = vrot.slane %v122, %v126
    %v128 = vlaneseq
    %v129 = vshrl.u32 %v128, 7
    %v130 = vsub.s32 1, %v129
    %v131 = vrot.slane %v122, %v130
    %134 = vmatprep.subr.mxu0 %v91
    %135 = vmatpush1.msra.mxu0 %v90
    %136 = vmatprep.subr.mxu0 %v93
    %137 = vmatpush1.msra.mxu0 %v92
    %138 = vmatprep.subr.mxu0 %v95
    %139 = vmatpush1.msra.mxu0 %v94
    %140 = vmatprep.subr.mxu0 %v97
    %141 = vmatpush1.msra.mxu0 %v96
    %142 = vmatprep.subr.mxu0 %v99
    %143 = vmatpush1.msra.mxu0 %v98
    %144 = vmatprep.subr.mxu0 %v101
    %145 = vmatpush1.msra.mxu0 %v100
    %146 = vmatprep.subr.mxu0 %v103
    %147 = vmatpush1.msra.mxu0 %v102
    %148 = vmatprep.subr.mxu0 %v105
    %149 = vmatpush1.msra.mxu0 %v104
    %150 = vmatprep.subr.mxu0 %v107
    %151 = vmatpush1.msra.mxu0 %v106
    %152 = vmatprep.subr.mxu0 %v109
    %153 = vmatpush1.msra.mxu0 %v108
    %154 = vmatprep.subr.mxu0 %v111
    %155 = vmatpush1.msra.mxu0 %v110
    %156 = vmatprep.subr.mxu0 %v113
    %157 = vmatpush1.msra.mxu0 %v112
    %158 = vmatprep.subr.mxu0 %v115
    %159 = vmatpush1.msra.mxu0 %v114
    %160 = vmatprep.subr.mxu0 %v117
    %161 = vmatpush1.msra.mxu0 %v116
    %162 = vmatprep.subr.mxu0 %v119
    %163 = vmatpush1.msra.mxu0 %v118
    %164 = vmatprep.subr.mxu0 %v121
    %165 = vmatpush1.msra.mxu0 %v120
    %166 = vmatprep.subr.mxu0 0.0
    %167 = vmatpush1.msra.mxu0 0.0
    %168 = vmatprep.subr.mxu0 0.0
    %169 = vmatpush1.msra.mxu0 0.0
    %170 = vmatprep.subr.mxu0 0.0
    %171 = vmatpush1.msra.mxu0 0.0
    %172 = vmatprep.subr.mxu0 0.0
    %173 = vmatpush1.msra.mxu0 0.0
    %174 = vmatprep.subr.mxu0 0.0
    %175 = vmatpush1.msra.mxu0 0.0
    %176 = vmatprep.subr.mxu0 0.0
    %177 = vmatpush1.msra.mxu0 0.0
    %178 = vmatprep.subr.mxu0 0.0
    %179 = vmatpush1.msra.mxu0 0.0
    %180 = vmatprep.subr.mxu0 0.0
    %181 = vmatpush1.msra.mxu0 0.0
    %182 = vmatprep.subr.mxu0 0.0
    %183 = vmatpush1.msra.mxu0 0.0
    %184 = vmatprep.subr.mxu0 0.0
    %185 = vmatpush1.msra.mxu0 0.0
    %186 = vmatprep.subr.mxu0 0.0
    %187 = vmatpush1.msra.mxu0 0.0
    %188 = vmatprep.subr.mxu0 0.0
    %189 = vmatpush1.msra.mxu0 0.0
    %190 = vmatprep.subr.mxu0 0.0
    %191 = vmatpush1.msra.mxu0 0.0
    %192 = vmatprep.subr.mxu0 0.0
    %193 = vmatpush1.msra.mxu0 0.0
    %194 = vmatprep.subr.mxu0 0.0
    %195 = vmatpush1.msra.mxu0 0.0
    %196 = vmatprep.subr.mxu0 0.0
    %197 = vmatpush1.msra.mxu0 0.0
    %198 = vmatprep.mubr.f32.mxu0 0.0
    %199 = vmatmul.mubr.f32.gmra.mrb[0].mxu0 %v88
    %v200 = vpop.f32.mrb[0].mxu0
    %v201 = vadd.f32 %v127, %v200
    %v202 = vpop.f32.mrb[0].mxu0
    %v203 = vadd.f32 %v131, %v202
    %204 = vmatprep.mubr.f32.mxu0 0.0
    %205 = vmatmul.mubr.f32.gmra.mrb[0].mxu0 %v89
    %v206 = vpop.f32.mrb[0].mxu0
    %v207 = vadd.f32 %v127, %v206
    %v208 = vpop.f32.mrb[0].mxu0
    %v209 = vadd.f32 %v131, %v208
    %210 = vdwg.mxu0
    %v211 = vld [vmem:[#allocation7] sm:$0xff]
    %v212 = vld [vmem:[#allocation7 + $0x8] sm:$0xff]
    %v213 = vld [vmem:[#allocation7 + $0x10] sm:$0xff]
    %v214 = vld [vmem:[#allocation7 + $0x18] sm:$0xff]
    %v215 = vld [vmem:[#allocation7 + $0x20] sm:$0xff]
    %v216 = vld [vmem:[#allocation7 + $0x28] sm:$0xff]
    %v217 = vld [vmem:[#allocation7 + $0x30] sm:$0xff]
    %v218 = vld [vmem:[#allocation7 + $0x38] sm:$0xff]
    %v219 = vld [vmem:[#allocation7 + $0x40] sm:$0xff]
    %v220 = vld [vmem:[#allocation7 + $0x48] sm:$0xff]
    %v221 = vld [vmem:[#allocation7 + $0x50] sm:$0xff]
    %v222 = vld [vmem:[#allocation7 + $0x58] sm:$0xff]
    %v223 = vld [vmem:[#allocation7 + $0x60] sm:$0xff]
    %v224 = vld [vmem:[#allocation7 + $0x68] sm:$0xff]
    %v225 = vld [vmem:[#allocation7 + $0x70] sm:$0xff]
    %v226 = vld [vmem:[#allocation7 + $0x78] sm:$0xff]
    %v227 = vld [vmem:[#allocation7 + $0x80] sm:$0xff]
    %v228 = vld [vmem:[#allocation7 + $0x88] sm:$0xff]
    %v229 = vld [vmem:[#allocation7 + $0x90] sm:$0xff]
    %v230 = vld [vmem:[#allocation7 + $0x98] sm:$0xff]
    %v231 = vld [vmem:[#allocation7 + $0xa0] sm:$0xff]
    %v232 = vld [vmem:[#allocation7 + $0xa8] sm:$0xff]
    %v233 = vld [vmem:[#allocation7 + $0xb0] sm:$0xff]
    %v234 = vld [vmem:[#allocation7 + $0xb8] sm:$0xff]
    %v235 = vld [vmem:[#allocation7 + $0xc0] sm:$0xff]
    %v236 = vld [vmem:[#allocation7 + $0xc8] sm:$0xff]
    %v237 = vld [vmem:[#allocation7 + $0xd0] sm:$0xff]
    %v238 = vld [vmem:[#allocation7 + $0xd8] sm:$0xff]
    %v239 = vld [vmem:[#allocation7 + $0xe0] sm:$0xff]
    %v240 = vld [vmem:[#allocation7 + $0xe8] sm:$0xff]
    %v241 = vld [vmem:[#allocation7 + $0xf0] sm:$0xff]
    %v242 = vld [vmem:[#allocation7 + $0xf8] sm:$0xff]
    %v243 = vld [vmem:[%s4] sm:$0x3]
    %v245 = vlaneseq
    %v246 = vshrl.u32 %v245, 7
    %v247 = vsub.s32 0, %v246
    %v248 = vrot.slane %v243, %v247
    %v249 = vlaneseq
    %v250 = vshrl.u32 %v249, 7
    %v251 = vsub.s32 1, %v250
    %v252 = vrot.slane %v243, %v251
    %255 = vmatprep.subr.mxu0 %v212
    %256 = vmatpush1.msra.mxu0 %v211
    %257 = vmatprep.subr.mxu0 %v214
    %258 = vmatpush1.msra.mxu0 %v213
    %259 = vmatprep.subr.mxu0 %v216
    %260 = vmatpush1.msra.mxu0 %v215
    %261 = vmatprep.subr.mxu0 %v218
    %262 = vmatpush1.msra.mxu0 %v217
    %263 = vmatprep.subr.mxu0 %v220
    %264 = vmatpush1.msra.mxu0 %v219
    %265 = vmatprep.subr.mxu0 %v222
    %266 = vmatpush1.msra.mxu0 %v221
    %267 = vmatprep.subr.mxu0 %v224
    %268 = vmatpush1.msra.mxu0 %v223
    %269 = vmatprep.subr.mxu0 %v226
    %270 = vmatpush1.msra.mxu0 %v225
    %271 = vmatprep.subr.mxu0 %v228
    %272 = vmatpush1.msra.mxu0 %v227
    %273 = vmatprep.subr.mxu0 %v230
    %274 = vmatpush1.msra.mxu0 %v229
    %275 = vmatprep.subr.mxu0 %v232
    %276 = vmatpush1.msra.mxu0 %v231
    %277 = vmatprep.subr.mxu0 %v234
    %278 = vmatpush1.msra.mxu0 %v233
    %279 = vmatprep.subr.mxu0 %v236
    %280 = vmatpush1.msra.mxu0 %v235
    %281 = vmatprep.subr.mxu0 %v238
    %282 = vmatpush1.msra.mxu0 %v237
    %283 = vmatprep.subr.mxu0 %v240
    %284 = vmatpush1.msra.mxu0 %v239
    %285 = vmatprep.subr.mxu0 %v242
    %286 = vmatpush1.msra.mxu0 %v241
    %287 = vmatprep.subr.mxu0 0.0
    %288 = vmatpush1.msra.mxu0 0.0
    %289 = vmatprep.subr.mxu0 0.0
    %290 = vmatpush1.msra.mxu0 0.0
    %291 = vmatprep.subr.mxu0 0.0
    %292 = vmatpush1.msra.mxu0 0.0
    %293 = vmatprep.subr.mxu0 0.0
    %294 = vmatpush1.msra.mxu0 0.0
    %295 = vmatprep.subr.mxu0 0.0
    %296 = vmatpush1.msra.mxu0 0.0
    %297 = vmatprep.subr.mxu0 0.0
    %298 = vmatpush1.msra.mxu0 0.0
    %299 = vmatprep.subr.mxu0 0.0
    %300 = vmatpush1.msra.mxu0 0.0
    %301 = vmatprep.subr.mxu0 0.0
    %302 = vmatpush1.msra.mxu0 0.0
    %303 = vmatprep.subr.mxu0 0.0
    %304 = vmatpush1.msra.mxu0 0.0
    %305 = vmatprep.subr.mxu0 0.0
    %306 = vmatpush1.msra.mxu0 0.0
    %307 = vmatprep.subr.mxu0 0.0
    %308 = vmatpush1.msra.mxu0 0.0
    %309 = vmatprep.subr.mxu0 0.0
    %310 = vmatpush1.msra.mxu0 0.0
    %311 = vmatprep.subr.mxu0 0.0
    %312 = vmatpush1.msra.mxu0 0.0
    %313 = vmatprep.subr.mxu0 0.0
    %314 = vmatpush1.msra.mxu0 0.0
    %315 = vmatprep.subr.mxu0 0.0
    %316 = vmatpush1.msra.mxu0 0.0
    %317 = vmatprep.subr.mxu0 0.0
    %318 = vmatpush1.msra.mxu0 0.0
    %319 = vmatprep.mubr.f32.mxu0 0.0
    %320 = vmatmul.mubr.f32.gmra.mrb[0].mxu0 %v88
    %v321 = vpop.f32.mrb[0].mxu0
    %v322 = vadd.f32 %v248, %v321
    %v323 = vpop.f32.mrb[0].mxu0
    %v324 = vadd.f32 %v252, %v323
    %325 = vmatprep.mubr.f32.mxu0 0.0
    %326 = vmatmul.mubr.f32.gmra.mrb[0].mxu0 %v89
    %v327 = vpop.f32.mrb[0].mxu0
    %v328 = vadd.f32 %v248, %v327
    %v329 = vpop.f32.mrb[0].mxu0
    %v330 = vadd.f32 %v252, %v329
    %331 = vdwg.mxu0
    %v332 = vmul.f32 %v201, 0.5
    %v333 = vmul.f32 %v203, 0.5
    %v334 = vmul.f32 %v207, 0.5
    %v335 = vmul.f32 %v209, 0.5
    %v336 = vmul.f32 %v201, 0.70710677
    %v337 = vmul.f32 %v203, 0.70710677
    %v338 = vmul.f32 %v207, 0.70710677
    %v339 = vmul.f32 %v209, 0.70710677
    %v340 = verf.f32.pop %v336
    %v341 = verf.f32.pop %v337
    %v342 = verf.f32.pop %v338
    %v343 = verf.f32.pop %v339
    %v344 = vadd.f32 %v340, 1.0
    %v345 = vadd.f32 %v341, 1.0
    %v346 = vadd.f32 %v342, 1.0
    %v347 = vadd.f32 %v343, 1.0
    %v348 = vmul.f32 %v332, %v344
    %v349 = vmul.f32 %v333, %v345
    %v350 = vmul.f32 %v334, %v346
    %v351 = vmul.f32 %v335, %v347
    %v352 = vmul.f32 %v348, %v322
    %v353 = vmul.f32 %v349, %v324
    %v354 = vmul.f32 %v350, %v328
    %v355 = vmul.f32 %v351, %v330
    %v356 = vld [vmem:[#allocation8] sm:$0xff]
    %v357 = vld [vmem:[#allocation8 + $0x8] sm:$0xff]
    %v358 = vld [vmem:[#allocation8 + $0x10] sm:$0xff]
    %v359 = vld [vmem:[#allocation8 + $0x18] sm:$0xff]
    %v360 = vld [vmem:[#allocation8 + $0x20] sm:$0xff]
    %v361 = vld [vmem:[#allocation8 + $0x28] sm:$0xff]
    %v362 = vld [vmem:[#allocation8 + $0x30] sm:$0xff]
    %v363 = vld [vmem:[#allocation8 + $0x38] sm:$0xff]
    %v364 = vld [vmem:[#allocation8 + $0x40] sm:$0xff]
    %v365 = vld [vmem:[#allocation8 + $0x48] sm:$0xff]
    %v366 = vld [vmem:[#allocation8 + $0x50] sm:$0xff]
    %v367 = vld [vmem:[#allocation8 + $0x58] sm:$0xff]
    %v368 = vld [vmem:[#allocation8 + $0x60] sm:$0xff]
    %v369 = vld [vmem:[#allocation8 + $0x68] sm:$0xff]
    %v370 = vld [vmem:[#allocation8 + $0x70] sm:$0xff]
    %v371 = vld [vmem:[#allocation8 + $0x78] sm:$0xff]
    %v372 = vld [vmem:[#allocation8 + $0x80] sm:$0xff]
    %v373 = vld [vmem:[#allocation8 + $0x88] sm:$0xff]
    %v374 = vld [vmem:[#allocation8 + $0x90] sm:$0xff]
    %v375 = vld [vmem:[#allocation8 + $0x98] sm:$0xff]
    %v376 = vld [vmem:[#allocation8 + $0xa0] sm:$0xff]
    %v377 = vld [vmem:[#allocation8 + $0xa8] sm:$0xff]
    %v378 = vld [vmem:[#allocation8 + $0xb0] sm:$0xff]
    %v379 = vld [vmem:[#allocation8 + $0xb8] sm:$0xff]
    %v380 = vld [vmem:[#allocation8 + $0xc0] sm:$0xff]
    %v381 = vld [vmem:[#allocation8 + $0xc8] sm:$0xff]
    %v382 = vld [vmem:[#allocation8 + $0xd0] sm:$0xff]
    %v383 = vld [vmem:[#allocation8 + $0xd8] sm:$0xff]
    %v384 = vld [vmem:[#allocation8 + $0xe0] sm:$0xff]
    %v385 = vld [vmem:[#allocation8 + $0xe8] sm:$0xff]
    %v386 = vld [vmem:[#allocation8 + $0xf0] sm:$0xff]
    %v387 = vld [vmem:[#allocation8 + $0xf8] sm:$0xff]
    %388 = vmatprep.subr.mxu0 0.0
    %389 = vmatpush1.msra.mxu0 %v356
    %390 = vmatprep.subr.mxu0 0.0
    %391 = vmatpush1.msra.mxu0 %v357
    %392 = vmatprep.subr.mxu0 0.0
    %393 = vmatpush1.msra.mxu0 %v358
    %394 = vmatprep.subr.mxu0 0.0
    %395 = vmatpush1.msra.mxu0 %v359
    %396 = vmatprep.subr.mxu0 0.0
    %397 = vmatpush1.msra.mxu0 %v360
    %398 = vmatprep.subr.mxu0 0.0
    %399 = vmatpush1.msra.mxu0 %v361
    %400 = vmatprep.subr.mxu0 0.0
    %401 = vmatpush1.msra.mxu0 %v362
    %402 = vmatprep.subr.mxu0 0.0
    %403 = vmatpush1.msra.mxu0 %v363
    %404 = vmatprep.subr.mxu0 0.0
    %405 = vmatpush1.msra.mxu0 %v364
    %406 = vmatprep.subr.mxu0 0.0
    %407 = vmatpush1.msra.mxu0 %v365
    %408 = vmatprep.subr.mxu0 0.0
    %409 = vmatpush1.msra.mxu0 %v366
    %410 = vmatprep.subr.mxu0 0.0
    %411 = vmatpush1.msra.mxu0 %v367
    %412 = vmatprep.subr.mxu0 0.0
    %413 = vmatpush1.msra.mxu0 %v368
    %414 = vmatprep.subr.mxu0 0.0
    %415 = vmatpush1.msra.mxu0 %v369
    %416 = vmatprep.subr.mxu0 0.0
    %417 = vmatpush1.msra.mxu0 %v370
    %418 = vmatprep.subr.mxu0 0.0
    %419 = vmatpush1.msra.mxu0 %v371
    %420 = vmatprep.subr.mxu0 0.0
    %421 = vmatpush1.msra.mxu0 %v372
    %422 = vmatprep.subr.mxu0 0.0
    %423 = vmatpush1.msra.mxu0 %v373
    %424 = vmatprep.subr.mxu0 0.0
    %425 = vmatpush1.msra.mxu0 %v374
    %426 = vmatprep.subr.mxu0 0.0
    %427 = vmatpush1.msra.mxu0 %v375
    %428 = vmatprep.subr.mxu0 0.0
    %429 = vmatpush1.msra.mxu0 %v376
    %430 = vmatprep.subr.mxu0 0.0
    %431 = vmatpush1.msra.mxu0 %v377
    %432 = vmatprep.subr.mxu0 0.0
    %433 = vmatpush1.msra.mxu0 %v378
    %434 = vmatprep.subr.mxu0 0.0
    %435 = vmatpush1.msra.mxu0 %v379
    %436 = vmatprep.subr.mxu0 0.0
    %437 = vmatpush1.msra.mxu0 %v380
    %438 = vmatprep.subr.mxu0 0.0
    %439 = vmatpush1.msra.mxu0 %v381
    %440 = vmatprep.subr.mxu0 0.0
    %441 = vmatpush1.msra.mxu0 %v382
    %442 = vmatprep.subr.mxu0 0.0
    %443 = vmatpush1.msra.mxu0 %v383
    %444 = vmatprep.subr.mxu0 0.0
    %445 = vmatpush1.msra.mxu0 %v384
    %446 = vmatprep.subr.mxu0 0.0
    %447 = vmatpush1.msra.mxu0 %v385
    %448 = vmatprep.subr.mxu0 0.0
    %449 = vmatpush1.msra.mxu0 %v386
    %450 = vmatprep.subr.mxu0 0.0
    %451 = vmatpush1.msra.mxu0 %v387
    %452 = vmatprep.mubr.f32.mxu0 %v353
    %453 = vmatmul.mubr.f32.gmra.mrb[0].mxu0 %v352
    %v454 = vpop.f32.mrb[0].mxu0
    %v455 = vadd.f32 0.0, %v454
    %v456 = vpop.f32.mrb[0].mxu0
    %457 = vmatprep.mubr.f32.mxu0 %v355
    %458 = vmatmul.mubr.f32.gmra.mrb[0].mxu0 %v354
    %v459 = vpop.f32.mrb[0].mxu0
    %v460 = vadd.f32 0.0, %v459
    %v461 = vpop.f32.mrb[0].mxu0
    %462 = vdwg.mxu0
    %p463 = scmp.eq.s32.totalorder 0, 0
    // Predicated region
    $region54: #{tpu_custom_call.1} parent=1 // pred_check
      %p464 = pneg %p463
    $region55: #{tpu_custom_call.1} parent=1 // pred_check_branch
      %466 = sbr.rel (%p464) target = $region57
    $region56: #{tpu_custom_call.1} parent=1 // pred_region
      %467 = vst [vmem:[#allocation10] sm:$0xff] %v455
      %468 = vst [vmem:[#allocation10 + $0x8] sm:$0xff] %v460
    $region57: #{tpu_custom_call.1} parent=1 // pred_fallthru
      _
    %p469 = scmp.ne.s32.totalorder 0, 0
    // Predicated region
    $region58: #{tpu_custom_call.1} parent=1 // pred_check
      %p470 = pneg %p469
    $region59: #{tpu_custom_call.1} parent=1 // pred_check_branch
      %472 = sbr.rel (%p470) target = $region61
    $region60: #{tpu_custom_call.1} parent=1 // pred_region
      %v473 = vld [vmem:[#allocation10] sm:$0xff]
      %v474 = vld [vmem:[#allocation10 + $0x8] sm:$0xff]
      %v475 = vadd.f32 %v473, %v455
      %v476 = vadd.f32 %v474, %v460
      %477 = vst [vmem:[#allocation10] sm:$0xff] %v475
      %478 = vst [vmem:[#allocation10 + $0x8] sm:$0xff] %v476
    $region61: #{tpu_custom_call.1} parent=1 // pred_fallthru
      _
    // Predicated region
    $region62: #{tpu_custom_call.1} parent=1 // pred_check
      %p479 = pneg %p463
    $region63: #{tpu_custom_call.1} parent=1 // pred_check_branch
      %481 = sbr.rel (%p479) target = $region65
    $region64: #{tpu_custom_call.1} parent=1 // pred_region
      %v482 = vld [vmem:[#allocation10] sm:$0xff]
      %v483 = vld [vmem:[#allocation10 + $0x8] sm:$0xff]
      %v484 = vld [vmem:[%s6] sm:$0x1]
      %v486 = vlaneseq
      %v487 = vshrl.u32 %v486, 7
      %v488 = vsub.s32 0, %v487
      %v489 = vrot.slane %v484, %v488
      %v491 = vadd.f32 %v482, %v489
      %v492 = vadd.f32 %v483, %v489
      %v493 = vadd.f32 %v491, %v88
      %v494 = vadd.f32 %v492, %v89
      %495 = vadd.xlane.f32.xlu0 %v493
      %v496 = vpop.xlane.xlu0 %495
      %497 = vadd.xlane.f32.xlu0 %v494
      %v498 = vpop.xlane.xlu0 %497
      %v499 = vmul.f32 %v496, 0.015625
      %v500 = vmul.f32 %v498, 0.015625
      %v501 = vlaneseq
      %v502 = vand.u32 %v501, 127
      %vm503 = vcmp.lt.s32.totalorder %v502, 64
      %v504 = vsub.f32 %v493, %v499
      %v505 = vsub.f32 %v494, %v500
      %v506 = vsel %vm503, %v504, 0.0
      %v507 = vsel %vm503, %v505, 0.0
      %v508 = vmul.f32 %v506, %v506
      %v509 = vmul.f32 %v507, %v507
      %510 = vadd.xlane.f32.xlu0 %v508
      %v511 = vpop.xlane.xlu0 %510
      %512 = vadd.xlane.f32.xlu0 %v509
      %v513 = vpop.xlane.xlu0 %512
      %v514 = vmul.f32 %v511, 0.015625
      %v515 = vmul.f32 %v513, 0.015625
      %v516 = vadd.f32 %v514, 1e-05
      %v517 = vadd.f32 %v515, 1e-05
      %v518 = vrsqrt.pop %v516
      %v519 = vrsqrt.pop %v517
      %v520 = vmul.f32 %v506, %v518
      %v521 = vmul.f32 %v507, %v519
      %v522 = vld [vmem:[%s7] sm:$0x1]
      %v524 = vlaneseq
      %v525 = vshrl.u32 %v524, 7
      %v526 = vsub.s32 0, %v525
      %v527 = vrot.slane %v522, %v526
      %v529 = vmul.f32 %v520, %v527
      %v530 = vmul.f32 %v521, %v527
      %v531 = vld [vmem:[%s8] sm:$0x1]
      %v533 = vlaneseq
      %v534 = vshrl.u32 %v533, 7
      %v535 = vsub.s32 0, %v534
      %v536 = vrot.slane %v531, %v535
      %v538 = vadd.f32 %v529, %v536
      %v539 = vadd.f32 %v530, %v536
      %540 = vst [vmem:[#allocation10] sm:$0xff] %v538
      %541 = vst [vmem:[#allocation10 + $0x8] sm:$0xff] %v539
    $region65: #{tpu_custom_call.1} parent=1 // pred_fallthru
      _
    // Predicated region
    $region66: #{tpu_custom_call.1} parent=1 // pred_check
      _
    $region67: #{tpu_custom_call.1} parent=1 // pred_check_branch
      %543 = sbr.rel (0) target = $region69
    $region68: #{tpu_custom_call.1} parent=1 // pred_region
      %s545 = ssub.s32 256, 256
      %546 = vsyncadd [#allocation4], %s545
      %s547 = sshll.u32 [#allocation10], 4
      %s548 = int_to_ptr.vmem [resolvable:$true] %s547
      %553 = dma.vmem_to_hbm [thread:$0]  %s548, 256, %s9, [#allocation4], 128, 128, 8
    $region69: #{tpu_custom_call.1} parent=1 // pred_fallthru
      _
    // Predicated region
    $region70: #{tpu_custom_call.1} parent=1 // pred_check
      _
    $region71: #{tpu_custom_call.1} parent=1 // pred_check_branch
      %555 = sbr.rel (0) target = $region73
    $region72: #{tpu_custom_call.1} parent=1 // pred_region
      %556 = dma.done [#allocation4], 256
    $region73: #{tpu_custom_call.1} parent=1 // pred_fallthru
      _
    %557 = vsyncpa [#allocation3], 1
    %558 = vsyncpa [#allocation6], 1
    %559 = vsyncpa [#allocation9], 1
    %560 = vsyncpa [#allocation4], 1

</llo_original>
